<compile_context>
chip_gen: v6e
topology: v6e:2x2x1
jax: 0.10.0
libtpu: 0.0.40
codegen_flags: <defaults>
</compile_context>

<pallas_src>
import functools

import jax
import jax.numpy as jnp
from jax.experimental import pallas as pl
from jax.experimental.pallas import tpu as pltpu

SI_DIM, SO_DIM, SG_DIM, ACT_DIM = 3, 12, 3, 3
H1, H2, HG = 32, 16, 64
IN_DIM = SI_DIM + SO_DIM + SG_DIM          # 18 : packed [si | so | sg]
LANES = 128                                # lane-dense width of every hidden layer

# 16-aligned row offsets inside the packed weight slab (bf16 pack quantum).
OFF_W1, OFF_B1 = 0, 32
OFF_W2, OFF_B2 = 48, 176
OFF_W3, OFF_B3 = 192, 320
OFF_W4, OFF_B4 = 336, 464
SLAB_ROWS = 480


# ----------------------------------------------------------------------------
# Kernel
# ----------------------------------------------------------------------------
def actor_kernel(x_ref, w_ref, out_ref):
    f32, bf16 = jnp.float32, jnp.bfloat16
    dot = functools.partial(jnp.dot, preferred_element_type=f32)

    x = x_ref[...]                                               # [TB, 18] bf16

    # Fused layer 1 (+ si-part of global L1):
    #   lanes  0:32  = so @ W_o1 + b_o1
    #   lanes 32:64  = sg @ W_g1 + b_g1
    #   lanes 64:128 = si @ W_f1[32:35]     (raw carry -> global L1, NO ReLU)
    b1 = w_ref[OFF_B1:OFF_B1 + 1, :].astype(f32)
    h1_pre = dot(x, w_ref[OFF_W1:OFF_W1 + IN_DIM, :]) + b1       # [TB,128] f32
    lane = jax.lax.broadcasted_iota(jnp.int32, h1_pre.shape, 1)
    h1 = jnp.where(lane < 2 * H1, jnp.maximum(h1_pre, 0.0), h1_pre).astype(bf16)

    # Layer 2 (block-diagonal; W2 rows 64:128 are zero so the raw carry lanes
    # never leak):  lanes 0:16 = ao, lanes 16:32 = ag, rest 0.
    b2 = w_ref[OFF_B2:OFF_B2 + 1, :].astype(f32)
    h2 = jnp.maximum(dot(h1, w_ref[OFF_W2:OFF_W2 + LANES, :]) + b2,
                     0.0).astype(bf16)                           # [TB,128] bf16

    # Global layer 1: z lanes 64:128 = [ao|ag]@W_f1[:32] + si@W_f1[32:] + b_f1.
    # h1 lanes 0:64 pollute z lanes 0:64, which are killed by zero W4 rows.
    b3 = w_ref[OFF_B3:OFF_B3 + 1, :].astype(f32)
    z = jnp.maximum(dot(h2, w_ref[OFF_W3:OFF_W3 + LANES, :]) + h1.astype(f32) + b3,
                    0.0).astype(bf16)                            # [TB,128] bf16

    # Global layer 2 + Tanh: action lives in lanes 0:3.
    b4 = w_ref[OFF_B4:OFF_B4 + 1, :].astype(f32)
    a4 = dot(z, w_ref[OFF_W4:OFF_W4 + LANES, :]) + b4
    out_ref[...] = jnp.tanh(a4[:, :ACT_DIM])


# ----------------------------------------------------------------------------
# Parameter init / packing (wrapper side, pure JAX)
# ----------------------------------------------------------------------------
def xavier_uniform(key, fan_in, fan_out, dtype=jnp.float32):
    bound = (6.0 / (fan_in + fan_out)) ** 0.5
    return jax.random.uniform(key, (fan_in, fan_out), dtype=dtype,
                              minval=-bound, maxval=bound)


def init_actor_params(key):
    ks = jax.random.split(key, 8)
    return {
        # obs branch
        "w_o1": xavier_uniform(ks[0], SO_DIM, H1), "b_o1": jnp.zeros((1, H1), jnp.float32),
        "w_o2": xavier_uniform(ks[1], H1, H2),     "b_o2": jnp.zeros((1, H2), jnp.float32),
        # goal branch
        "w_g1": xavier_uniform(ks[2], SG_DIM, H1), "b_g1": jnp.zeros((1, H1), jnp.float32),
        "w_g2": xavier_uniform(ks[3], H1, H2),     "b_g2": jnp.zeros((1, H2), jnp.float32),
        # global net
        "w_f1": xavier_uniform(ks[4], 2 * H2 + SI_DIM, HG), "b_f1": jnp.zeros((1, HG), jnp.float32),
        "w_f2": xavier_uniform(ks[5], HG, ACT_DIM),         "b_f2": jnp.zeros((1, ACT_DIM), jnp.float32),
    }


def pack_actor_params(params, dtype=jnp.bfloat16):
    """Pack all Actor weights/biases into one lane-dense [SLAB_ROWS, 128] slab."""
    slab = jnp.zeros((SLAB_ROWS, LANES), jnp.float32)
    # fused layer 1 over packed input [si | so | sg]
    slab = slab.at[OFF_W1:OFF_W1 + SI_DIM, 2 * H1:2 * H1 + HG].set(params["w_f1"][2 * H2:])
    slab = slab.at[OFF_W1 + SI_DIM:OFF_W1 + SI_DIM + SO_DIM, 0:H1].set(params["w_o1"])
    slab = slab.at[OFF_W1 + SI_DIM + SO_DIM:OFF_W1 + IN_DIM, H1:2 * H1].set(params["w_g1"])
    slab = slab.at[OFF_B1, 0:H1].set(params["b_o1"][0])
    slab = slab.at[OFF_B1, H1:2 * H1].set(params["b_g1"][0])
    # layer 2 (block-diagonal; rows 64:128 stay zero)
    slab = slab.at[OFF_W2:OFF_W2 + H1, 0:H2].set(params["w_o2"])
    slab = slab.at[OFF_W2 + H1:OFF_W2 + 2 * H1, H2:2 * H2].set(params["w_g2"])
    slab = slab.at[OFF_B2, 0:H2].set(params["b_o2"][0])
    slab = slab.at[OFF_B2, H2:2 * H2].set(params["b_g2"][0])
    # global layer 1 ([ao|ag] part; output lanes 64:128)
    slab = slab.at[OFF_W3:OFF_W3 + 2 * H2, 2 * H1:2 * H1 + HG].set(params["w_f1"][:2 * H2])
    slab = slab.at[OFF_B3, 2 * H1:2 * H1 + HG].set(params["b_f1"][0])
    # global layer 2 (input rows 64:128 = z lanes; rows 0:64 stay zero)
    slab = slab.at[OFF_W4 + 2 * H1:OFF_W4 + 2 * H1 + HG, 0:ACT_DIM].set(params["w_f2"])
    slab = slab.at[OFF_B4, 0:ACT_DIM].set(params["b_f2"][0])
    return slab.astype(dtype)


# ----------------------------------------------------------------------------
# Forward wrapper
# ----------------------------------------------------------------------------
def _round_up(n, m):
    return ((n + m - 1) // m) * m


def _num_tensorcores():
    try:
        kind = jax.devices()[0].device_kind.lower()
    except Exception:
        return 1
    return 2 if "v7" in kind else 1            # v7x: 2 TCs/chip; v5e/v6e: 1


def actor_forward(packed_w, si, so, sg, *, batch_tile=None):
    """Fused Actor forward.  packed_w comes from pack_actor_params(params)."""
    B = si.shape[0]
    # Packed bf16 input [si|so|sg]: single lane-dense DMA stream, no in-kernel cast.
    x = jnp.concatenate([si, so, sg], axis=-1).astype(jnp.bfloat16)      # [B, 18]

    n_cores = _num_tensorcores()
    if batch_tile is None:
        # single-TC chips: big tiles amortize ~0.35us/grid-step overhead;
        # v7x: smaller per-TC tiles so both TensorCores get work.
        batch_tile = 1024 if n_cores > 1 else 2048

    # Minimal-padding tiling: padded rows are pure wasted MXU time.
    n_tiles = max(pl.cdiv(B, batch_tile), 1)
    if n_cores > 1 and B >= 16 * n_cores:
        n_tiles = _round_up(n_tiles, n_cores)    # even split across TensorCores
    tb = _round_up(pl.cdiv(B, n_tiles), 16)      # 16: bf16 sublane pack quantum
    b_pad = n_tiles * tb
    if b_pad != B:
        x = jnp.pad(x, ((0, b_pad - B), (0, 0)))
    grid = (n_tiles,)

    # Actual MXU work per padded row (4 lane-padded matmul streams).
    flops_per_row = 2 * (IN_DIM * LANES + 3 * LANES * LANES)

    out = pl.pallas_call(
        actor_kernel,
        out_shape=jax.ShapeDtypeStruct((b_pad, ACT_DIM), jnp.float32),
        grid=grid,
        in_specs=[
            pl.BlockSpec((tb, IN_DIM), lambda i: (i, 0)),          # batch-tiled input
            pl.BlockSpec((SLAB_ROWS, LANES), lambda i: (0, 0)),    # weights, resident
        ],
        out_specs=pl.BlockSpec((tb, ACT_DIM), lambda i: (i, 0)),
        compiler_params=pltpu.CompilerParams(
            dimension_semantics=("parallel",),    # v7x megacore: shard batch over 2 TCs
            vmem_limit_bytes=32 * 1024 * 1024,
        ),
        cost_estimate=pl.CostEstimate(
            flops=flops_per_row * b_pad,
            transcendentals=b_pad * ACT_DIM,
            bytes_accessed=b_pad * (IN_DIM * 2 + ACT_DIM * 4) + SLAB_ROWS * LANES * 2,
        ),
    )(x, packed_w)
    return out[:B]


# ----------------------------------------------------------------------------
# References
# ----------------------------------------------------------------------------
def actor_ref(params, si, so, sg):
    """Exact f32 reference matching the PyTorch module semantics."""
    relu = lambda t: jnp.maximum(t, 0.0)
    ao = relu(relu(so @ params["w_o1"] + params["b_o1"]) @ params["w_o2"] + params["b_o2"])
    ag = relu(relu(sg @ params["w_g1"] + params["b_g1"]) @ params["w_g2"] + params["b_g2"])
    x = jnp.concatenate([ao, ag, si], axis=-1)
    z = relu(x @ params["w_f1"] + params["b_f1"])
    return jnp.tanh(z @ params["w_f2"] + params["b_f2"])


def actor_ref_bf16(params, si, so, sg):
    """Reference mirroring the kernel: bf16 matmul operands, f32 accumulation,
    fused ReLU+bf16 down-casts, si-contribution carried through one bf16 round-trip."""
    bf16, f32 = jnp.bfloat16, jnp.float32
    q = lambda t: t.astype(bf16)
    qb = lambda t: t.astype(bf16).astype(f32)
    dot = lambda a, b: jnp.dot(q(a), q(b), preferred_element_type=f32)
    relu = lambda t: jnp.maximum(t, 0.0)
    w_f1 = params["w_f1"]
    h_o = q(relu(dot(so, params["w_o1"]) + qb(params["b_o1"])))
    h_g = q(relu(dot(sg, params["w_g1"]) + qb(params["b_g1"])))
    h_si = q(dot(si, w_f1[2 * H2:])).astype(f32)          # raw carry lanes 64:128
    a_o = q(relu(dot(h_o, params["w_o2"]) + qb(params["b_o2"])))
    a_g = q(relu(dot(h_g, params["w_g2"]) + qb(params["b_g2"])))
    z = q(relu(dot(a_o, w_f1[:H2]) + dot(a_g, w_f1[H2:2 * H2]) + h_si + qb(params["b_f1"])))
    return jnp.tanh(dot(z, params["w_f2"]) + qb(params["b_f2"]))


# ----------------------------------------------------------------------------
if __name__ == "__main__":
    key = jax.random.PRNGKey(0)
    k_param, k_data = jax.random.split(key, 2)

    params = init_actor_params(k_param)
    packed_w = pack_actor_params(params)

    for B in (8, 13):   # 13 exercises the padding / tile-rounding path
        ksi, kso, ksg = jax.random.split(jax.random.fold_in(k_data, B), 3)
        si = jax.random.normal(ksi, (B, SI_DIM), jnp.float32)
        so = jax.random.normal(kso, (B, SO_DIM), jnp.float32)
        sg = jax.random.normal(ksg, (B, SG_DIM), jnp.float32)

        out = jax.block_until_ready(actor_forward(packed_w, si, so, sg))
        assert out.shape == (B, ACT_DIM)

        # Tight check vs a reference that mirrors the kernel's bf16-operand matmuls.
        ref_q = actor_ref_bf16(params, si, so, sg)
        assert jnp.allclose(out, ref_q, atol=5e-3, rtol=5e-3), "mismatch vs bf16 reference"

        # Loose sanity check vs exact f32 module semantics (bf16 operand error only).
        ref_f = actor_ref(params, si, so, sg)
        assert jnp.allclose(out, ref_f, atol=1e-1, rtol=1e-1), "mismatch vs f32 reference"

    print("KERNEL_OK")
</pallas_src>

<mosaic_0001>
module attributes {stable_mosaic.version = 11 : i64} {
  func.func @actor_kernel(%arg0: i32, %arg1: memref<16x18xbf16, #tpu.memory_space<vmem>>, %arg2: memref<480x128xbf16, #tpu.memory_space<vmem>>, %arg3: memref<16x3xf32, #tpu.memory_space<vmem>>) attributes {dimension_semantics = [#tpu.dimension_semantics<parallel>], iteration_bounds = array<i64: 1>, scalar_prefetch = 0 : i64, scratch_operands = 0 : i64, tpu.core_type = #tpu.core_type<tc>, window_params = [{transform_indices = @transform_0, window_bounds = array<i64: 16, 18>}, {pipeline_mode = #tpu.pipeline_mode<synchronous>, transform_indices = @transform_1, window_bounds = array<i64: 480, 128>}, {transform_indices = @transform_2, window_bounds = array<i64: 16, 3>}]} {
    %c0 = arith.constant 0 : index
    %c0_0 = arith.constant 0 : index
    %0 = vector.load %arg1[%c0, %c0_0] : memref<16x18xbf16, #tpu.memory_space<vmem>>, vector<16x18xbf16>
    %c32 = arith.constant 32 : index
    %c0_1 = arith.constant 0 : index
    %1 = vector.load %arg2[%c32, %c0_1] : memref<480x128xbf16, #tpu.memory_space<vmem>>, vector<1x128xbf16>
    %2 = arith.extf %1 : vector<1x128xbf16> to vector<1x128xf32>
    %c0_2 = arith.constant 0 : index
    %c0_3 = arith.constant 0 : index
    %3 = vector.load %arg2[%c0_2, %c0_3] : memref<480x128xbf16, #tpu.memory_space<vmem>>, vector<18x128xbf16>
    %cst = arith.constant dense<0.000000e+00> : vector<16x128xf32>
    %4 = tpu.matmul %0, %3, %cst {dimension_numbers = #tpu.dot_dimension_numbers<[1], [0], [0], [1], [0, 0, 1, 1], [], []>} : vector<16x18xbf16>, vector<18x128xbf16>, vector<16x128xf32> -> vector<16x128xf32>
    %5 = vector.broadcast %2 : vector<1x128xf32> to vector<16x128xf32>
    %6 = arith.addf %4, %5 : vector<16x128xf32>
    %7 = tpu.iota {dimensions = array<i32: 1>} : vector<16x128xi32>
    %c64_i32 = arith.constant 64 : i32
    %8 = vector.broadcast %c64_i32 : i32 to vector<16x128xi32>
    %9 = arith.cmpi slt, %7, %8 : vector<16x128xi32>
    %cst_4 = arith.constant 0.000000e+00 : f32
    %10 = vector.broadcast %cst_4 : f32 to vector<16x128xf32>
    %11 = arith.maximumf %6, %10 : vector<16x128xf32>
    %12 = arith.select %9, %11, %6 : vector<16x128xi1>, vector<16x128xf32>
    %13 = arith.truncf %12 : vector<16x128xf32> to vector<16x128xbf16>
    %c176 = arith.constant 176 : index
    %c0_5 = arith.constant 0 : index
    %14 = vector.load %arg2[%c176, %c0_5] : memref<480x128xbf16, #tpu.memory_space<vmem>>, vector<1x128xbf16>
    %15 = arith.extf %14 : vector<1x128xbf16> to vector<1x128xf32>
    %c48 = arith.constant 48 : index
    %c0_6 = arith.constant 0 : index
    %16 = vector.load %arg2[%c48, %c0_6] : memref<480x128xbf16, #tpu.memory_space<vmem>>, vector<128x128xbf16>
    %cst_7 = arith.constant dense<0.000000e+00> : vector<16x128xf32>
    %17 = tpu.matmul %13, %16, %cst_7 {dimension_numbers = #tpu.dot_dimension_numbers<[1], [0], [0], [1], [0, 0, 1, 1], [], []>} : vector<16x128xbf16>, vector<128x128xbf16>, vector<16x128xf32> -> vector<16x128xf32>
    %18 = vector.broadcast %15 : vector<1x128xf32> to vector<16x128xf32>
    %19 = arith.addf %17, %18 : vector<16x128xf32>
    %cst_8 = arith.constant 0.000000e+00 : f32
    %20 = vector.broadcast %cst_8 : f32 to vector<16x128xf32>
    %21 = arith.maximumf %19, %20 : vector<16x128xf32>
    %22 = arith.truncf %21 : vector<16x128xf32> to vector<16x128xbf16>
    %c320 = arith.constant 320 : index
    %c0_9 = arith.constant 0 : index
    %23 = vector.load %arg2[%c320, %c0_9] : memref<480x128xbf16, #tpu.memory_space<vmem>>, vector<1x128xbf16>
    %24 = arith.extf %23 : vector<1x128xbf16> to vector<1x128xf32>
    %c192 = arith.constant 192 : index
    %c0_10 = arith.constant 0 : index
    %25 = vector.load %arg2[%c192, %c0_10] : memref<480x128xbf16, #tpu.memory_space<vmem>>, vector<128x128xbf16>
    %cst_11 = arith.constant dense<0.000000e+00> : vector<16x128xf32>
    %26 = tpu.matmul %22, %25, %cst_11 {dimension_numbers = #tpu.dot_dimension_numbers<[1], [0], [0], [1], [0, 0, 1, 1], [], []>} : vector<16x128xbf16>, vector<128x128xbf16>, vector<16x128xf32> -> vector<16x128xf32>
    %27 = arith.extf %13 : vector<16x128xbf16> to vector<16x128xf32>
    %28 = arith.addf %26, %27 : vector<16x128xf32>
    %29 = vector.broadcast %24 : vector<1x128xf32> to vector<16x128xf32>
    %30 = arith.addf %28, %29 : vector<16x128xf32>
    %cst_12 = arith.constant 0.000000e+00 : f32
    %31 = vector.broadcast %cst_12 : f32 to vector<16x128xf32>
    %32 = arith.maximumf %30, %31 : vector<16x128xf32>
    %33 = arith.truncf %32 : vector<16x128xf32> to vector<16x128xbf16>
    %c464 = arith.constant 464 : index
    %c0_13 = arith.constant 0 : index
    %34 = vector.load %arg2[%c464, %c0_13] : memref<480x128xbf16, #tpu.memory_space<vmem>>, vector<1x128xbf16>
    %35 = arith.extf %34 : vector<1x128xbf16> to vector<1x128xf32>
    %c336 = arith.constant 336 : index
    %c0_14 = arith.constant 0 : index
    %36 = vector.load %arg2[%c336, %c0_14] : memref<480x128xbf16, #tpu.memory_space<vmem>>, vector<128x128xbf16>
    %cst_15 = arith.constant dense<0.000000e+00> : vector<16x128xf32>
    %37 = tpu.matmul %33, %36, %cst_15 {dimension_numbers = #tpu.dot_dimension_numbers<[1], [0], [0], [1], [0, 0, 1, 1], [], []>} : vector<16x128xbf16>, vector<128x128xbf16>, vector<16x128xf32> -> vector<16x128xf32>
    %38 = vector.broadcast %35 : vector<1x128xf32> to vector<16x128xf32>
    %39 = arith.addf %37, %38 : vector<16x128xf32>
    %40 = vector.extract_strided_slice %39 {offsets = [0, 0], sizes = [16, 3], strides = [1, 1]} : vector<16x128xf32> to vector<16x3xf32>
    %41 = math.tanh %40 : vector<16x3xf32>
    %c0_16 = arith.constant 0 : index
    %c0_17 = arith.constant 0 : index
    %42 = vector.load %arg3[%c0_16, %c0_17] : memref<16x3xf32, #tpu.memory_space<vmem>>, vector<16x3xf32>
    tpu.vector_store %arg3[%c0_16, %c0_17], %41 {strides = array<i32>} : memref<16x3xf32, #tpu.memory_space<vmem>>, vector<16x3xf32>,
    return
  }
  func.func @transform_0(%arg0: i32) -> (i32, i32) {
    %c0_i32 = arith.constant 0 : i32
    %c0_i32_0 = arith.constant 0 : i32
    return %arg0, %c0_i32 : i32, i32
  }
  func.func @transform_1(%arg0: i32) -> (i32, i32) {
    %c0_i32 = arith.constant 0 : i32
    %c0_i32_0 = arith.constant 0 : i32
    %c0_i32_1 = arith.constant 0 : i32
    return %c0_i32, %c0_i32_0 : i32, i32
  }
  func.func @transform_2(%arg0: i32) -> (i32, i32) {
    %c0_i32 = arith.constant 0 : i32
    %c0_i32_0 = arith.constant 0 : i32
    return %arg0, %c0_i32 : i32, i32
  }
}

</mosaic_0001>

<llo_original>
// kernel: tpu_custom_call.1
$region0: #{tpu_custom_call.1}
  #allocation0 [shape = 'u32[]', space=smem, size = 0x4, offset = 0x4, fixed_abs, tag = 'smem constant byte address 0x4 - core index']
  #allocation1 [shape = 'u32[144,128]{1,0:T(1,128)}', space=vmem, size = 0x12000, scoped, tag = 'internal scratch']
  %s0 = inlined_call_operand.hbm [shape: bf16[16,18], index: 0, kind: input, shape index: {}]
  %s1 = inlined_call_operand.hbm [shape: bf16[480,128], index: 1, kind: input, shape index: {}]
  %s2 = inlined_call_operand.vmem [shape: f32[16,3], index: 2, kind: output, shape index: {}]
  %s3 = sld [smem:[#allocation0]]
  $region26: #{tpu_custom_call.1} parent=0
    _
  %s5 = ssub.s32 1, %s3
  %s6 = scalar_select 0, %s5, %s3
  $region1: #{tpu_custom_call.1} parent=0
    #allocation2 [shape = 'u8[4096]{0}', space=vmem, size = 0x1000, scoped, tag = 'input window, operand 0, single buffered']
    #allocation3 [shape = 's32[1]{0}', space=sflag, size = 0x4, scoped, tag = 'scoped memory for tpu_custom_call.1']
    #allocation4 [shape = 'u8[122880]{0}', space=vmem, size = 0x1e000, scoped, tag = 'input window, operand 1, single buffered']
    #allocation5 [shape = 's32[1]{0}', space=sflag, size = 0x4, scoped, tag = 'scoped memory for tpu_custom_call.1']
    %7 = vsyncpa [#allocation3], 0
    %8 = vsyncpa [#allocation5], 0
    // Predicated region
    $region2: #{tpu_custom_call.1} parent=1 // pred_check
      _
    $region3: #{tpu_custom_call.1} parent=1 // pred_check_branch
      %10 = sbr.rel (0) target = $region5
    $region4: #{tpu_custom_call.1} parent=1 // pred_region
      %s12 = ssub.s32 128, 128
      %13 = vsyncadd [#allocation3], %s12
      %s14 = sshll.u32 [#allocation2], 4
      %s15 = int_to_ptr.vmem [resolvable:$true] %s14
      %20 = dma.hbm_to_vmem [thread:$0]  %s0, 128, %s15, [#allocation3], 64, 64, 4
    $region5: #{tpu_custom_call.1} parent=1 // pred_fallthru
      _
    // Predicated region
    $region6: #{tpu_custom_call.1} parent=1 // pred_check
      _
    $region7: #{tpu_custom_call.1} parent=1 // pred_check_branch
      %22 = sbr.rel (0) target = $region9
    $region8: #{tpu_custom_call.1} parent=1 // pred_region
      %s24 = ssub.s32 3840, 3840
      %25 = vsyncadd [#allocation5], %s24
      %s26 = sshll.u32 [#allocation4], 4
      %s27 = int_to_ptr.vmem [resolvable:$true] %s26
      %32 = dma.hbm_to_vmem [thread:$0]  %s1, 3840, %s27, [#allocation5], 64, 64, 4
    $region9: #{tpu_custom_call.1} parent=1 // pred_fallthru
      _
    // Predicated region
    $region10: #{tpu_custom_call.1} parent=1 // pred_check
      _
    $region11: #{tpu_custom_call.1} parent=1 // pred_check_branch
      %34 = sbr.rel (0) target = $region13
    $region12: #{tpu_custom_call.1} parent=1 // pred_region
      %35 = dma.done [#allocation3], 128
    $region13: #{tpu_custom_call.1} parent=1 // pred_fallthru
      _
    // Predicated region
    $region14: #{tpu_custom_call.1} parent=1 // pred_check
      _
    $region15: #{tpu_custom_call.1} parent=1 // pred_check_branch
      %37 = sbr.rel (0) target = $region17
    $region16: #{tpu_custom_call.1} parent=1 // pred_region
      %38 = dma.done [#allocation5], 3840
    $region17: #{tpu_custom_call.1} parent=1 // pred_fallthru
      _
    %v40 = vld [vmem:[#allocation2] sm:$0xf]
    %v41 = vld [vmem:[#allocation2 + $0x4] sm:$0xf]
    %v42 = vld [vmem:[#allocation4 + $0x10] sm:$0x1]
    %v43 = vunpack.c.l.bf16 %v42
    %v44 = vld [vmem:[#allocation4] sm:$0xf]
    %v45 = vld [vmem:[#allocation4 + $0x4] sm:$0xf]
    %v46 = vld [vmem:[#allocation4 + $0x8] sm:$0x1]
    %v47 = vlaneseq
    %v48 = vshrl.u32 %v47, 7
    %v49 = vsub.s32 0, %v48
    %v50 = vrot.slane %v43, %v49
    %v53 = vunpack.c.l.b16 %v40
    %v54 = vunpack.c.l.b16 %v41
    %v55 = vpack.c.b16 %v54, %v53
    %v59 = vunpack.c.l.b16 %v44
    %v60 = vunpack.c.l.b16 %v45
    %v61 = vunpack.c.l.b16 %v46
    %v62 = vpack.c.b16 %v60, %v59
    %v63 = vpack.c.b16 %v61, %v61
    %vm65 = vcmask 146432
    %v67 = vsel %vm65, %v55, 0
    %vm69 = vcmask 1040384
    %v71 = vsel %vm69, %v63, 0
    %73 = vmatprep.subr.bf16.mxu0 0
    %74 = vmatpush1.bf16.msra.mxu0 0
    %75 = vmatprep.subr.bf16.mxu0 0
    %76 = vmatpush1.bf16.msra.mxu0 0
    %77 = vmatprep.subr.bf16.mxu0 0
    %78 = vmatpush1.bf16.msra.mxu0 0
    %79 = vmatprep.subr.bf16.mxu0 0
    %80 = vmatpush1.bf16.msra.mxu0 0
    %81 = vmatprep.subr.bf16.mxu0 0
    %82 = vmatpush1.bf16.msra.mxu0 0
    %83 = vmatprep.subr.bf16.mxu0 0
    %84 = vmatpush1.bf16.msra.mxu0 0
    %85 = vmatprep.subr.bf16.mxu0 0
    %86 = vmatpush1.bf16.msra.mxu0 %v71
    %87 = vmatprep.subr.bf16.mxu0 0
    %88 = vmatpush1.bf16.msra.mxu0 %v62
    %89 = vmatprep.subr.bf16.mxu0 0
    %90 = vmatpush2.bf16.msra.mxu0 0
    %91 = vmatprep.subr.bf16.mxu0 0
    %92 = vmatpush2.bf16.msra.mxu0 0
    %93 = vmatprep.subr.bf16.mxu0 0
    %94 = vmatpush2.bf16.msra.mxu0 0
    %95 = vmatprep.subr.bf16.mxu0 0
    %96 = vmatpush2.bf16.msra.mxu0 0
    %97 = vmatprep.subr.bf16.mxu0 0
    %98 = vmatpush2.bf16.msra.mxu0 0
    %99 = vmatprep.subr.bf16.mxu0 0
    %100 = vmatpush2.bf16.msra.mxu0 0
    %101 = vmatprep.subr.bf16.mxu0 0
    %102 = vmatpush2.bf16.msra.mxu0 0
    %103 = vmatprep.subr.bf16.mxu0 0
    %104 = vmatpush2.bf16.msra.mxu0 0
    %105 = vmatprep.mubr.bf16.mxu0 0
    %106 = vmatmul.mubr.bf16.gmra.mxu0 %v67
    %v107 = vpop.f32.mrf.mxu0
    %v108 = vadd.f32 %v50, %v107
    %v109 = vpop.f32.mrf.mxu0
    %v110 = vpop.f32.mrf.mxu0
    %v111 = vadd.f32 %v50, %v110
    %v112 = vpop.f32.mrf.mxu0
    %113 = vdwg.mxu0
    %v114 = vlaneseq
    %v115 = vand.u32 %v114, 127
    %vm116 = vcmp.lt.s32.totalorder %v115, 64
    %v117 = vmax.f32 %v108, 0.0
    %v118 = vmax.f32 %v111, 0.0
    %v119 = vsel %vm116, %v117, %v108
    %v120 = vsel %vm116, %v118, %v111
    %v121 = vpack.c.bf16 %v120, %v119
    %v122 = vld [vmem:[#allocation4 + $0x58] sm:$0x1]
    %v123 = vunpack.c.l.bf16 %v122
    %v124 = vld [vmem:[#allocation4 + $0x18] sm:$0xf]
    %v125 = vld [vmem:[#allocation4 + $0x1c] sm:$0xf]
    %v126 = vld [vmem:[#allocation4 + $0x20] sm:$0xf]
    %v127 = vld [vmem:[#allocation4 + $0x24] sm:$0xf]
    %v128 = vld [vmem:[#allocation4 + $0x28] sm:$0xf]
    %v129 = vld [vmem:[#allocation4 + $0x2c] sm:$0xf]
    %v130 = vld [vmem:[#allocation4 + $0x30] sm:$0xf]
    %v131 = vld [vmem:[#allocation4 + $0x34] sm:$0xf]
    %v132 = vld [vmem:[#allocation4 + $0x38] sm:$0xf]
    %v133 = vld [vmem:[#allocation4 + $0x3c] sm:$0xf]
    %v134 = vld [vmem:[#allocation4 + $0x40] sm:$0xf]
    %v135 = vld [vmem:[#allocation4 + $0x44] sm:$0xf]
    %v136 = vld [vmem:[#allocation4 + $0x48] sm:$0xf]
    %v137 = vld [vmem:[#allocation4 + $0x4c] sm:$0xf]
    %v138 = vld [vmem:[#allocation4 + $0x50] sm:$0xf]
    %v139 = vld [vmem:[#allocation4 + $0x54] sm:$0xf]
    %v140 = vlaneseq
    %v141 = vshrl.u32 %v140, 7
    %v142 = vsub.s32 0, %v141
    %v143 = vrot.slane %v123, %v142
    %v160 = vunpack.c.l.b16 %v124
    %v161 = vunpack.c.l.b16 %v125
    %v162 = vunpack.c.l.b16 %v126
    %v163 = vunpack.c.l.b16 %v127
    %v164 = vunpack.c.l.b16 %v128
    %v165 = vunpack.c.l.b16 %v129
    %v166 = vunpack.c.l.b16 %v130
    %v167 = vunpack.c.l.b16 %v131
    %v168 = vunpack.c.l.b16 %v132
    %v169 = vunpack.c.l.b16 %v133
    %v170 = vunpack.c.l.b16 %v134
    %v171 = vunpack.c.l.b16 %v135
    %v172 = vunpack.c.l.b16 %v136
    %v173 = vunpack.c.l.b16 %v137
    %v174 = vunpack.c.l.b16 %v138
    %v175 = vunpack.c.l.b16 %v139
    %v176 = vpack.c.b16 %v161, %v160
    %v177 = vpack.c.b16 %v163, %v162
    %v178 = vpack.c.b16 %v165, %v164
    %v179 = vpack.c.b16 %v167, %v166
    %v180 = vpack.c.b16 %v169, %v168
    %v181 = vpack.c.b16 %v171, %v170
    %v182 = vpack.c.b16 %v173, %v172
    %v183 = vpack.c.b16 %v175, %v174
    %192 = vmatprep.subr.bf16.mxu0 0
    %193 = vmatpush1.bf16.msra.mxu0 %v183
    %194 = vmatprep.subr.bf16.mxu0 0
    %195 = vmatpush1.bf16.msra.mxu0 %v182
    %196 = vmatprep.subr.bf16.mxu0 0
    %197 = vmatpush1.bf16.msra.mxu0 %v181
    %198 = vmatprep.subr.bf16.mxu0 0
    %199 = vmatpush1.bf16.msra.mxu0 %v180
    %200 = vmatprep.subr.bf16.mxu0 0
    %201 = vmatpush1.bf16.msra.mxu0 %v179
    %202 = vmatprep.subr.bf16.mxu0 0
    %203 = vmatpush1.bf16.msra.mxu0 %v178
    %204 = vmatprep.subr.bf16.mxu0 0
    %205 = vmatpush1.bf16.msra.mxu0 %v177
    %206 = vmatprep.subr.bf16.mxu0 0
    %207 = vmatpush1.bf16.msra.mxu0 %v176
    %208 = vmatprep.subr.bf16.mxu0 0
    %209 = vmatpush2.bf16.msra.mxu0 0
    %210 = vmatprep.subr.bf16.mxu0 0
    %211 = vmatpush2.bf16.msra.mxu0 0
    %212 = vmatprep.subr.bf16.mxu0 0
    %213 = vmatpush2.bf16.msra.mxu0 0
    %214 = vmatprep.subr.bf16.mxu0 0
    %215 = vmatpush2.bf16.msra.mxu0 0
    %216 = vmatprep.subr.bf16.mxu0 0
    %217 = vmatpush2.bf16.msra.mxu0 0
    %218 = vmatprep.subr.bf16.mxu0 0
    %219 = vmatpush2.bf16.msra.mxu0 0
    %220 = vmatprep.subr.bf16.mxu0 0
    %221 = vmatpush2.bf16.msra.mxu0 0
    %222 = vmatprep.subr.bf16.mxu0 0
    %223 = vmatpush2.bf16.msra.mxu0 0
    %224 = vmatprep.mubr.bf16.mxu0 0
    %225 = vmatmul.mubr.bf16.gmra.mxu0 %v121
    %v226 = vpop.f32.mrf.mxu0
    %v227 = vadd.f32 %v143, %v226
    %v228 = vpop.f32.mrf.mxu0
    %v229 = vpop.f32.mrf.mxu0
    %v230 = vadd.f32 %v143, %v229
    %v231 = vpop.f32.mrf.mxu0
    %232 = vdwg.mxu0
    %v233 = vmax.f32 %v227, 0.0
    %v234 = vmax.f32 %v230, 0.0
    %v235 = vpack.c.bf16 %v234, %v233
    %v236 = vld [vmem:[#allocation4 + $0xa0] sm:$0x1]
    %v237 = vunpack.c.l.bf16 %v236
    %v238 = vld [vmem:[#allocation4 + $0x60] sm:$0xf]
    %v239 = vld [vmem:[#allocation4 + $0x64] sm:$0xf]
    %v240 = vld [vmem:[#allocation4 + $0x68] sm:$0xf]
    %v241 = vld [vmem:[#allocation4 + $0x6c] sm:$0xf]
    %v242 = vld [vmem:[#allocation4 + $0x70] sm:$0xf]
    %v243 = vld [vmem:[#allocation4 + $0x74] sm:$0xf]
    %v244 = vld [vmem:[#allocation4 + $0x78] sm:$0xf]
    %v245 = vld [vmem:[#allocation4 + $0x7c] sm:$0xf]
    %v246 = vld [vmem:[#allocation4 + $0x80] sm:$0xf]
    %v247 = vld [vmem:[#allocation4 + $0x84] sm:$0xf]
    %v248 = vld [vmem:[#allocation4 + $0x88] sm:$0xf]
    %v249 = vld [vmem:[#allocation4 + $0x8c] sm:$0xf]
    %v250 = vld [vmem:[#allocation4 + $0x90] sm:$0xf]
    %v251 = vld [vmem:[#allocation4 + $0x94] sm:$0xf]
    %v252 = vld [vmem:[#allocation4 + $0x98] sm:$0xf]
    %v253 = vld [vmem:[#allocation4 + $0x9c] sm:$0xf]
    %v254 = vunpack.c.l.bf16 %v121
    %v255 = vunpack.c.h.bf16 %v121
    %v272 = vunpack.c.l.b16 %v238
    %v273 = vunpack.c.l.b16 %v239
    %v274 = vunpack.c.l.b16 %v240
    %v275 = vunpack.c.l.b16 %v241
    %v276 = vunpack.c.l.b16 %v242
    %v277 = vunpack.c.l.b16 %v243
    %v278 = vunpack.c.l.b16 %v244
    %v279 = vunpack.c.l.b16 %v245
    %v280 = vunpack.c.l.b16 %v246
    %v281 = vunpack.c.l.b16 %v247
    %v282 = vunpack.c.l.b16 %v248
    %v283 = vunpack.c.l.b16 %v249
    %v284 = vunpack.c.l.b16 %v250
    %v285 = vunpack.c.l.b16 %v251
    %v286 = vunpack.c.l.b16 %v252
    %v287 = vunpack.c.l.b16 %v253
    %v288 = vpack.c.b16 %v273, %v272
    %v289 = vpack.c.b16 %v275, %v274
    %v290 = vpack.c.b16 %v277, %v276
    %v291 = vpack.c.b16 %v279, %v278
    %v292 = vpack.c.b16 %v281, %v280
    %v293 = vpack.c.b16 %v283, %v282
    %v294 = vpack.c.b16 %v285, %v284
    %v295 = vpack.c.b16 %v287, %v286
    %304 = vmatprep.subr.bf16.mxu0 0
    %305 = vmatpush1.bf16.msra.mxu0 %v295
    %306 = vmatprep.subr.bf16.mxu0 0
    %307 = vmatpush1.bf16.msra.mxu0 %v294
    %308 = vmatprep.subr.bf16.mxu0 0
    %309 = vmatpush1.bf16.msra.mxu0 %v293
    %310 = vmatprep.subr.bf16.mxu0 0
    %311 = vmatpush1.bf16.msra.mxu0 %v292
    %312 = vmatprep.subr.bf16.mxu0 0
    %313 = vmatpush1.bf16.msra.mxu0 %v291
    %314 = vmatprep.subr.bf16.mxu0 0
    %315 = vmatpush1.bf16.msra.mxu0 %v290
    %316 = vmatprep.subr.bf16.mxu0 0
    %317 = vmatpush1.bf16.msra.mxu0 %v289
    %318 = vmatprep.subr.bf16.mxu0 0
    %319 = vmatpush1.bf16.msra.mxu0 %v288
    %320 = vmatprep.subr.bf16.mxu0 0
    %321 = vmatpush2.bf16.msra.mxu0 0
    %322 = vmatprep.subr.bf16.mxu0 0
    %323 = vmatpush2.bf16.msra.mxu0 0
    %324 = vmatprep.subr.bf16.mxu0 0
    %325 = vmatpush2.bf16.msra.mxu0 0
    %326 = vmatprep.subr.bf16.mxu0 0
    %327 = vmatpush2.bf16.msra.mxu0 0
    %328 = vmatprep.subr.bf16.mxu0 0
    %329 = vmatpush2.bf16.msra.mxu0 0
    %330 = vmatprep.subr.bf16.mxu0 0
    %331 = vmatpush2.bf16.msra.mxu0 0
    %332 = vmatprep.subr.bf16.mxu0 0
    %333 = vmatpush2.bf16.msra.mxu0 0
    %334 = vmatprep.subr.bf16.mxu0 0
    %335 = vmatpush2.bf16.msra.mxu0 0
    %336 = vmatprep.mubr.bf16.mxu0 0
    %337 = vmatmul.mubr.bf16.gmra.mxu0 %v235
    %v338 = vpop.f32.mrf.mxu0
    %v339 = vadd.f32 %v254, %v338
    %v340 = vpop.f32.mrf.mxu0
    %v341 = vpop.f32.mrf.mxu0
    %v342 = vadd.f32 %v255, %v341
    %v343 = vpop.f32.mrf.mxu0
    %344 = vdwg.mxu0
    %v345 = vlaneseq
    %v346 = vshrl.u32 %v345, 7
    %v347 = vsub.s32 0, %v346
    %v348 = vrot.slane %v237, %v347
    %v349 = vadd.f32 %v339, %v348
    %v350 = vadd.f32 %v342, %v348
    %v351 = vmax.f32 %v349, 0.0
    %v352 = vmax.f32 %v350, 0.0
    %v353 = vpack.c.bf16 %v352, %v351
    %v354 = vld [vmem:[#allocation4 + $0xe8] sm:$0x1]
    %v355 = vunpack.c.l.bf16 %v354
    %v356 = vld [vmem:[#allocation4 + $0xa8] sm:$0xf]
    %v357 = vld [vmem:[#allocation4 + $0xac] sm:$0xf]
    %v358 = vld [vmem:[#allocation4 + $0xb0] sm:$0xf]
    %v359 = vld [vmem:[#allocation4 + $0xb4] sm:$0xf]
    %v360 = vld [vmem:[#allocation4 + $0xb8] sm:$0xf]
    %v361 = vld [vmem:[#allocation4 + $0xbc] sm:$0xf]
    %v362 = vld [vmem:[#allocation4 + $0xc0] sm:$0xf]
    %v363 = vld [vmem:[#allocation4 + $0xc4] sm:$0xf]
    %v364 = vld [vmem:[#allocation4 + $0xc8] sm:$0xf]
    %v365 = vld [vmem:[#allocation4 + $0xcc] sm:$0xf]
    %v366 = vld [vmem:[#allocation4 + $0xd0] sm:$0xf]
    %v367 = vld [vmem:[#allocation4 + $0xd4] sm:$0xf]
    %v368 = vld [vmem:[#allocation4 + $0xd8] sm:$0xf]
    %v369 = vld [vmem:[#allocation4 + $0xdc] sm:$0xf]
    %v370 = vld [vmem:[#allocation4 + $0xe0] sm:$0xf]
    %v371 = vld [vmem:[#allocation4 + $0xe4] sm:$0xf]
    %v372 = vlaneseq
    %v373 = vshrl.u32 %v372, 7
    %v374 = vsub.s32 0, %v373
    %v375 = vrot.slane %v355, %v374
    %v392 = vunpack.c.l.b16 %v356
    %v393 = vunpack.c.l.b16 %v357
    %v394 = vunpack.c.l.b16 %v358
    %v395 = vunpack.c.l.b16 %v359
    %v396 = vunpack.c.l.b16 %v360
    %v397 = vunpack.c.l.b16 %v361
    %v398 = vunpack.c.l.b16 %v362
    %v399 = vunpack.c.l.b16 %v363
    %v400 = vunpack.c.l.b16 %v364
    %v401 = vunpack.c.l.b16 %v365
    %v402 = vunpack.c.l.b16 %v366
    %v403 = vunpack.c.l.b16 %v367
    %v404 = vunpack.c.l.b16 %v368
    %v405 = vunpack.c.l.b16 %v369
    %v406 = vunpack.c.l.b16 %v370
    %v407 = vunpack.c.l.b16 %v371
    %v408 = vpack.c.b16 %v393, %v392
    %v409 = vpack.c.b16 %v395, %v394
    %v410 = vpack.c.b16 %v397, %v396
    %v411 = vpack.c.b16 %v399, %v398
    %v412 = vpack.c.b16 %v401, %v400
    %v413 = vpack.c.b16 %v403, %v402
    %v414 = vpack.c.b16 %v405, %v404
    %v415 = vpack.c.b16 %v407, %v406
    %424 = vmatprep.subr.bf16.mxu0 0
    %425 = vmatpush1.bf16.msra.mxu0 %v415
    %426 = vmatprep.subr.bf16.mxu0 0
    %427 = vmatpush1.bf16.msra.mxu0 %v414
    %428 = vmatprep.subr.bf16.mxu0 0
    %429 = vmatpush1.bf16.msra.mxu0 %v413
    %430 = vmatprep.subr.bf16.mxu0 0
    %431 = vmatpush1.bf16.msra.mxu0 %v412
    %432 = vmatprep.subr.bf16.mxu0 0
    %433 = vmatpush1.bf16.msra.mxu0 %v411
    %434 = vmatprep.subr.bf16.mxu0 0
    %435 = vmatpush1.bf16.msra.mxu0 %v410
    %436 = vmatprep.subr.bf16.mxu0 0
    %437 = vmatpush1.bf16.msra.mxu0 %v409
    %438 = vmatprep.subr.bf16.mxu0 0
    %439 = vmatpush1.bf16.msra.mxu0 %v408
    %440 = vmatprep.subr.bf16.mxu0 0
    %441 = vmatpush2.bf16.msra.mxu0 0
    %442 = vmatprep.subr.bf16.mxu0 0
    %443 = vmatpush2.bf16.msra.mxu0 0
    %444 = vmatprep.subr.bf16.mxu0 0
    %445 = vmatpush2.bf16.msra.mxu0 0
    %446 = vmatprep.subr.bf16.mxu0 0
    %447 = vmatpush2.bf16.msra.mxu0 0
    %448 = vmatprep.subr.bf16.mxu0 0
    %449 = vmatpush2.bf16.msra.mxu0 0
    %450 = vmatprep.subr.bf16.mxu0 0
    %451 = vmatpush2.bf16.msra.mxu0 0
    %452 = vmatprep.subr.bf16.mxu0 0
    %453 = vmatpush2.bf16.msra.mxu0 0
    %454 = vmatprep.subr.bf16.mxu0 0
    %455 = vmatpush2.bf16.msra.mxu0 0
    %456 = vmatprep.mubr.bf16.mxu0 0
    %457 = vmatmul.mubr.bf16.gmra.mxu0 %v353
    %v458 = vpop.f32.mrf.mxu0
    %v459 = vadd.f32 %v375, %v458
    %v460 = vpop.f32.mrf.mxu0
    %v461 = vpop.f32.mrf.mxu0
    %v462 = vadd.f32 %v375, %v461
    %v463 = vpop.f32.mrf.mxu0
    %464 = vdwg.mxu0
    %v465 = vtanh.pop %v459
    %v466 = vtanh.pop %v462
    %vm467 = vcmask 23552
    %468 = vst.msk [vmem:[%s2] sm:$0xff] %vm467, %v465
    %469 = vst.msk [vmem:[%s2 + $0x8] sm:$0xff] %vm467, %v466
    // Predicated region
    $region18: #{tpu_custom_call.1} parent=1 // pred_check
      _
    $region19: #{tpu_custom_call.1} parent=1 // pred_check_branch
      %471 = sbr.rel (0) target = $region21
    $region20: #{tpu_custom_call.1} parent=1 // pred_region
      _
    $region21: #{tpu_custom_call.1} parent=1 // pred_fallthru
      _
    // Predicated region
    $region22: #{tpu_custom_call.1} parent=1 // pred_check
      _
    $region23: #{tpu_custom_call.1} parent=1 // pred_check_branch
      %473 = sbr.rel (0) target = $region25
    $region24: #{tpu_custom_call.1} parent=1 // pred_region
      _
    $region25: #{tpu_custom_call.1} parent=1 // pred_fallthru
      _
    %474 = vsyncpa [#allocation3], 1
    %475 = vsyncpa [#allocation5], 1

</llo_original>
